<compile_context>
chip_gen: v6e
topology: v6e:2x2x1
jax: 0.10.0
libtpu: 0.0.40
codegen_flags: <defaults>
</compile_context>

<pallas_src>
import functools

import jax
import jax.numpy as jnp
import numpy as np
from jax.experimental import pallas as pl
from jax.experimental.pallas import tpu as pltpu

WIDTH = 4  # MEEM default


def _sigmoid(x):
    # Same function as nn.Sigmoid; tanh runs in the EUP slot (no VPU divide).
    return 0.5 * jnp.tanh(0.5 * x) + 0.5


# ----------------------------- Pallas kernels ------------------------------

def in_conv_kernel(x_ref, w_ref, b_ref, o_ref):
    """1x1 conv (BN folded) + sigmoid at LOW resolution: (hidden,Cin)@(Cin,H*W)."""
    x = x_ref[...].astype(jnp.float32)
    y = jnp.dot(w_ref[...], x, preferred_element_type=jnp.float32,
                precision=jax.lax.Precision.HIGHEST) + b_ref[...]
    o_ref[...] = _sigmoid(y).astype(o_ref.dtype)


def meem_kernel(mid_ref, w_mid_ref, b_mid_ref, w_ee_ref, b_ee_ref,
                w_out_ref, b_out_ref, o_ref, *, wu):
    """MEEM stages + EdgeEnhancers + eagerly-accumulated out_conv.

    Operates on one batch element as a (hidden, Hu*Wu) slab: channels on the
    sublane axis, flattened upsampled spatial on the lane axis.
    """
    f32 = jnp.float32
    prec = jax.lax.Precision.HIGHEST

    mid = mid_ref[...].astype(f32)                 # (hidden, HW) = sigmoid(in_conv(x)) upsampled
    hw = mid.shape[-1]

    # Boundary masks, built once and reused by every pool.  They zero out the
    # lanes that a wrap-around roll would otherwise pull across a row / image
    # boundary, making roll+mask an exact zero-padded shift.
    lane = jax.lax.broadcasted_iota(jnp.int32, (1, hw), 1)
    col = lane % wu
    m_l = (col > 0).astype(f32)                    # has an in-row left  neighbour
    m_r = (col < wu - 1).astype(f32)               # has an in-row right neighbour
    m_t = (lane >= wu).astype(f32)                 # has an image row above
    m_b = (lane < hw - wu).astype(f32)             # has an image row below

    def pool(t):
        """3x3 avg pool, stride 1, zero pad 1, count_include_pad=True (/9).
        pltpu.roll keeps the shifts in the XLU slot (no concatenate temps);
        negative shifts are expressed as their positive modular equivalents."""
        h = t + pltpu.roll(t, 1, 1) * m_l + pltpu.roll(t, hw - 1, 1) * m_r
        v = h + pltpu.roll(h, wu, 1) * m_t + pltpu.roll(h, hw - wu, 1) * m_b
        return v * (1.0 / 9.0)

    def conv1x1(w, b, t):
        return jnp.dot(w, t, preferred_element_type=f32, precision=prec) + b

    # Eager out_conv accumulation: acc += w_out[i] @ piece_i as soon as each
    # branch output exists (no (WIDTH*hidden, HW) concat buffer, short live ranges).
    acc = jnp.dot(w_out_ref[0], mid, preferred_element_type=f32, precision=prec)

    # WIDTH-1 = 3 stages: tiny, so a static unrolled loop is fine here.
    for i in range(w_mid_ref.shape[0]):
        # MEEM body: pool -> mid_conv (conv + bn + sigmoid)
        mid = _sigmoid(conv1x1(w_mid_ref[i], b_mid_ref[i], pool(mid)))
        # EdgeEnhancer: edge = x - avgpool(x); edge = sigmoid(bn(conv(edge))); x + edge
        edge = _sigmoid(conv1x1(w_ee_ref[i], b_ee_ref[i], mid - pool(mid)))
        piece = mid + edge
        acc = acc + jnp.dot(w_out_ref[i + 1], piece,
                            preferred_element_type=f32, precision=prec)

    out = acc + b_out_ref[...]                     # out_conv bias (BN folded)
    o_ref[...] = jnp.maximum(out, 0.0).astype(o_ref.dtype)   # ReLU


# --------------------------------- wrapper ----------------------------------

def meum_forward(x, params):
    """x: (N, Cin, H, W) float32 (NCHW).  Returns (N, Cout, 2H, 2W)."""
    n, cin, h, w = x.shape
    hidden = cin // 2
    out_dim = params["w_out"].shape[0]
    hw_lo = h * w

    # --- in_conv + sigmoid at LOW resolution (commutes with nearest upsample).
    in_conv = pl.pallas_call(
        in_conv_kernel,
        out_shape=jax.ShapeDtypeStruct((n, hidden, hw_lo), jnp.float32),
        grid=(n,),
        in_specs=[
            pl.BlockSpec((None, cin, hw_lo), lambda i: (i, 0, 0)),
            pl.BlockSpec((hidden, cin), lambda i: (0, 0)),
            pl.BlockSpec((hidden, 1), lambda i: (0, 0)),
        ],
        out_specs=pl.BlockSpec((None, hidden, hw_lo), lambda i: (i, 0, 0)),
        compiler_params=pltpu.CompilerParams(dimension_semantics=("parallel",)),
    )
    mid_lo = in_conv(x.reshape(n, cin, hw_lo), params["w_in"], params["b_in"])

    # nn.Upsample(scale_factor=2), default mode='nearest' — pure data movement
    # as an XLA broadcast, now on hidden channels of activated data.
    hu, wu = 2 * h, 2 * w
    hw = hu * wu
    mid_up = jnp.repeat(jnp.repeat(mid_lo.reshape(n, hidden, h, w), 2, axis=2),
                        2, axis=3).reshape(n, hidden, hw)

    # Split out_conv weights per MEEM branch for eager accumulation in-kernel.
    w_out_r = params["w_out"].reshape(out_dim, WIDTH, hidden).transpose(1, 0, 2)

    meem = pl.pallas_call(
        functools.partial(meem_kernel, wu=wu),
        out_shape=jax.ShapeDtypeStruct((n, out_dim, hw), jnp.float32),
        grid=(n,),
        in_specs=[
            pl.BlockSpec((None, hidden, hw), lambda i: (i, 0, 0)),
            # grid-invariant (tiny) parameters: full-array blocks, constant maps
            pl.BlockSpec((WIDTH - 1, hidden, hidden), lambda i: (0, 0, 0)),
            pl.BlockSpec((WIDTH - 1, hidden, 1), lambda i: (0, 0, 0)),
            pl.BlockSpec((WIDTH - 1, hidden, hidden), lambda i: (0, 0, 0)),
            pl.BlockSpec((WIDTH - 1, hidden, 1), lambda i: (0, 0, 0)),
            pl.BlockSpec((WIDTH, out_dim, hidden), lambda i: (0, 0, 0)),
            pl.BlockSpec((out_dim, 1), lambda i: (0, 0)),
        ],
        out_specs=pl.BlockSpec((None, out_dim, hw), lambda i: (i, 0, 0)),
        compiler_params=pltpu.CompilerParams(dimension_semantics=("parallel",)),
    )
    out_flat = meem(mid_up, params["w_mid"], params["b_mid"],
                    params["w_ee"], params["b_ee"], w_out_r, params["b_out"])
    return out_flat.reshape(n, out_dim, hu, wu)


# ----------------------------- parameter setup -----------------------------

def _conv_bn_fold(key, cin, cout, eps=1e-5):
    """Synthetic Conv2d(1x1, bias=False) + BatchNorm2d (eval mode), folded."""
    k1, k2, k3, k4, k5 = jax.random.split(key, 5)
    w = jax.random.normal(k1, (cout, cin), jnp.float32) / np.sqrt(cin)
    gamma = jax.random.uniform(k2, (cout,), jnp.float32, 0.5, 1.5)
    beta = 0.1 * jax.random.normal(k3, (cout,), jnp.float32)
    mean = 0.1 * jax.random.normal(k4, (cout,), jnp.float32)
    var = jax.random.uniform(k5, (cout,), jnp.float32, 0.5, 1.5)
    scale = gamma / jnp.sqrt(var + eps)
    w_eff = w * scale[:, None]
    b_eff = (beta - mean * scale)[:, None]  # (cout, 1)
    return w_eff, b_eff


def make_params(key, in_channels, out_channels):
    hidden = in_channels // 2
    keys = jax.random.split(key, 2 + 2 * (WIDTH - 1))
    w_in, b_in = _conv_bn_fold(keys[0], in_channels, hidden)

    w_mid, b_mid, w_ee, b_ee = [], [], [], []
    for i in range(WIDTH - 1):
        wm, bm = _conv_bn_fold(keys[1 + i], hidden, hidden)
        we, be = _conv_bn_fold(keys[1 + (WIDTH - 1) + i], hidden, hidden)
        w_mid.append(wm); b_mid.append(bm)
        w_ee.append(we); b_ee.append(be)
    w_mid = jnp.stack(w_mid); b_mid = jnp.stack(b_mid)
    w_ee = jnp.stack(w_ee); b_ee = jnp.stack(b_ee)

    w_out, b_out = _conv_bn_fold(keys[-1], hidden * WIDTH, out_channels)

    return dict(w_in=w_in, b_in=b_in, w_mid=w_mid, b_mid=b_mid,
                w_ee=w_ee, b_ee=b_ee, w_out=w_out, b_out=b_out)


# ------------------------- pure-JAX reference (NCHW) ------------------------

def _avgpool3_ref(x):
    xp = jnp.pad(x, ((0, 0), (0, 0), (1, 1), (1, 1)))
    h, w = x.shape[2], x.shape[3]
    s = sum(xp[:, :, i:i + h, j:j + w] for i in range(3) for j in range(3))
    return s / 9.0


def _conv_ref(x, w, b):
    y = jnp.einsum('oc,nchw->nohw', w, x, precision=jax.lax.Precision.HIGHEST)
    return y + b.reshape(1, -1, 1, 1)


def meum_ref(x, params):
    x = jnp.repeat(jnp.repeat(x, 2, axis=2), 2, axis=3)
    mid = jax.nn.sigmoid(_conv_ref(x, params["w_in"], params["b_in"]))
    pieces = [mid]
    for i in range(WIDTH - 1):
        mid = _avgpool3_ref(mid)
        mid = jax.nn.sigmoid(_conv_ref(mid, params["w_mid"][i], params["b_mid"][i]))
        edge = mid - _avgpool3_ref(mid)
        edge = jax.nn.sigmoid(_conv_ref(edge, params["w_ee"][i], params["b_ee"][i]))
        pieces.append(mid + edge)
    cat = jnp.concatenate(pieces, axis=1)
    return jax.nn.relu(_conv_ref(cat, params["w_out"], params["b_out"]))


if __name__ == "__main__":
    key = jax.random.PRNGKey(0)
    kx, kp = jax.random.split(key)

    batch, in_channels, out_channels, spatial = 2, 4, 4, 16
    x = jax.random.normal(kx, (batch, in_channels, spatial, spatial), jnp.float32)
    params = make_params(kp, in_channels, out_channels)

    out = jax.block_until_ready(meum_forward(x, params))
    ref = jax.block_until_ready(meum_ref(x, params))

    assert out.shape == (batch, out_channels, 2 * spatial, 2 * spatial), out.shape
    np.testing.assert_allclose(np.asarray(out), np.asarray(ref),
                               rtol=1e-4, atol=1e-5)

    print("KERNEL_OK")
</pallas_src>

<mosaic_0001>
module attributes {stable_mosaic.version = 11 : i64} {
  func.func @in_conv_kernel(%arg0: i32, %arg1: memref<1x4x256xf32, #tpu.memory_space<vmem>>, %arg2: memref<2x4xf32, #tpu.memory_space<vmem>>, %arg3: memref<2x1xf32, #tpu.memory_space<vmem>>, %arg4: memref<1x2x256xf32, #tpu.memory_space<vmem>>) attributes {dimension_semantics = [#tpu.dimension_semantics<parallel>], iteration_bounds = array<i64: 2>, scalar_prefetch = 0 : i64, scratch_operands = 0 : i64, tpu.core_type = #tpu.core_type<tc>, window_params = [{transform_indices = @transform_0, window_bounds = array<i64: 1, 4, 256>}, {pipeline_mode = #tpu.pipeline_mode<synchronous>, transform_indices = @transform_1, window_bounds = array<i64: 2, 4>}, {pipeline_mode = #tpu.pipeline_mode<synchronous>, transform_indices = @transform_2, window_bounds = array<i64: 2, 1>}, {transform_indices = @transform_3, window_bounds = array<i64: 1, 2, 256>}]} {
    %c0 = arith.constant 0 : index
    %c0_0 = arith.constant 0 : index
    %c0_1 = arith.constant 0 : index
    %0 = vector.load %arg1[%c0, %c0_0, %c0_1] : memref<1x4x256xf32, #tpu.memory_space<vmem>>, vector<1x4x256xf32>
    %1 = vector.shape_cast %0 : vector<1x4x256xf32> to vector<4x256xf32>
    %c0_2 = arith.constant 0 : index
    %c0_3 = arith.constant 0 : index
    %2 = vector.load %arg2[%c0_2, %c0_3] : memref<2x4xf32, #tpu.memory_space<vmem>>, vector<2x4xf32>
    %cst = arith.constant dense<0.000000e+00> : vector<2x256xf32>
    %3 = tpu.matmul %2, %1, %cst {dimension_numbers = #tpu.dot_dimension_numbers<[1], [0], [0], [1], [0, 0, 1, 1], [], []>, precision = #tpu.contract_precision<fp32>} : vector<2x4xf32>, vector<4x256xf32>, vector<2x256xf32> -> vector<2x256xf32>
    %c0_4 = arith.constant 0 : index
    %c0_5 = arith.constant 0 : index
    %4 = vector.load %arg3[%c0_4, %c0_5] : memref<2x1xf32, #tpu.memory_space<vmem>>, vector<2x1xf32>
    %5 = vector.broadcast %4 : vector<2x1xf32> to vector<2x256xf32>
    %6 = arith.addf %3, %5 : vector<2x256xf32>
    %cst_6 = arith.constant 5.000000e-01 : f32
    %7 = vector.broadcast %cst_6 : f32 to vector<2x256xf32>
    %8 = arith.mulf %7, %6 : vector<2x256xf32>
    %9 = math.tanh %8 : vector<2x256xf32>
    %cst_7 = arith.constant 5.000000e-01 : f32
    %10 = vector.broadcast %cst_7 : f32 to vector<2x256xf32>
    %11 = arith.mulf %10, %9 : vector<2x256xf32>
    %cst_8 = arith.constant 5.000000e-01 : f32
    %12 = vector.broadcast %cst_8 : f32 to vector<2x256xf32>
    %13 = arith.addf %11, %12 : vector<2x256xf32>
    %c0_9 = arith.constant 0 : index
    %c0_10 = arith.constant 0 : index
    %c0_11 = arith.constant 0 : index
    %14 = vector.load %arg4[%c0_9, %c0_10, %c0_11] : memref<1x2x256xf32, #tpu.memory_space<vmem>>, vector<1x2x256xf32>
    %15 = vector.shape_cast %14 : vector<1x2x256xf32> to vector<2x256xf32>
    %16 = vector.shape_cast %13 : vector<2x256xf32> to vector<1x2x256xf32>
    tpu.vector_store %arg4[%c0_9, %c0_10, %c0_11], %16 {strides = array<i32>} : memref<1x2x256xf32, #tpu.memory_space<vmem>>, vector<1x2x256xf32>,
    return
  }
  func.func @transform_0(%arg0: i32) -> (i32, i32, i32) {
    %c0_i32 = arith.constant 0 : i32
    %c0_i32_0 = arith.constant 0 : i32
    %c0_i32_1 = arith.constant 0 : i32
    return %arg0, %c0_i32, %c0_i32_0 : i32, i32, i32
  }
  func.func @transform_1(%arg0: i32) -> (i32, i32) {
    %c0_i32 = arith.constant 0 : i32
    %c0_i32_0 = arith.constant 0 : i32
    %c0_i32_1 = arith.constant 0 : i32
    return %c0_i32, %c0_i32_0 : i32, i32
  }
  func.func @transform_2(%arg0: i32) -> (i32, i32) {
    %c0_i32 = arith.constant 0 : i32
    %c0_i32_0 = arith.constant 0 : i32
    %c0_i32_1 = arith.constant 0 : i32
    return %c0_i32, %c0_i32_0 : i32, i32
  }
  func.func @transform_3(%arg0: i32) -> (i32, i32, i32) {
    %c0_i32 = arith.constant 0 : i32
    %c0_i32_0 = arith.constant 0 : i32
    %c0_i32_1 = arith.constant 0 : i32
    return %arg0, %c0_i32, %c0_i32_0 : i32, i32, i32
  }
}

</mosaic_0001>

<llo_original>
// kernel: tpu_custom_call.1
$region0: #{tpu_custom_call.1}
  #allocation0 [shape = 'u32[]', space=smem, size = 0x4, offset = 0x4, fixed_abs, tag = 'smem constant byte address 0x4 - core index']
  #allocation1 [shape = 'u32[144,128]{1,0:T(1,128)}', space=vmem, size = 0x12000, scoped, tag = 'internal scratch']
  %s0 = inlined_call_operand.hbm [shape: f32[2,4,256], index: 0, kind: input, shape index: {}]
  %s1 = inlined_call_operand.vmem [shape: f32[2,4], index: 1, kind: input, shape index: {}]
  %s2 = inlined_call_operand.vmem [shape: f32[2,1], index: 2, kind: input, shape index: {}]
  %s3 = inlined_call_operand.hbm [shape: f32[2,2,256], index: 3, kind: output, shape index: {}]
  %s4 = sld [smem:[#allocation0]]
  $region49: #{tpu_custom_call.1} parent=0
    _
  %s6 = ssub.s32 1, %s4
  %s7 = scalar_select 0, %s6, %s4
  $region1: #{tpu_custom_call.1} parent=0
    #allocation2 [shape = 'u8[8192]{0}', space=vmem, size = 0x2000, scoped, tag = 'input window, operand 0']
    #allocation3 [shape = 's32[2]{0}', space=sflag, size = 0x8, scoped, tag = 'scoped memory for tpu_custom_call.1']
    #allocation4 [shape = 's32[2]{0}', space=sflag, size = 0x8, scoped, tag = 'scoped memory for tpu_custom_call.1']
    #allocation5 [shape = 'u8[4096]{0}', space=vmem, size = 0x1000, scoped, tag = 'output window, operand 0']
    %8 = vsyncpa [#allocation3], 0
    %s9 = scalar_lea.sflag [#allocation3], 1
    %10 = vsyncpa %s9, 0
    %11 = vsyncpa [#allocation4], 0
    %s12 = scalar_lea.sflag [#allocation4], 1
    %13 = vsyncpa %s12, 0
    loop: start=0, step=1, limit=4
    $region2: #{tpu_custom_call.1} parent=1 // loop_pre_header
      _
    $region3: #{tpu_custom_call.1} parent=1 // loop_header
      %s15 = sphi 0, %s19
      %p16 = scmp.ge.s32.totalorder %s15, 4
      %s25 = sphi 0, %s27
      %s28 = sphi 0, %s25
      %s29 = sphi 0, %s28
      %s45 = sphi 0, %s29
      %s49 = sphi 0, %s49
      %s51 = sphi 0, %s49
      %s52 = sphi 0, %s51
      %s66 = sphi 0, %s52
      %s70 = sphi 0, %s70
      %s72 = sphi 0, %s70
      %s73 = sphi 0, %s72
      %s87 = sphi 0, %s73
      %s93 = sphi 0, %s95
      %s96 = sphi 0, %s93
      %s97 = sphi 0, %s96
      %s113 = sphi 0, %s97
    $region4: #{tpu_custom_call.1} parent=1 // loop_header_branch
      %18 = sbr.rel (%p16) target = $region8
    $region5: #{tpu_custom_call.1} parent=1 // loop_body
      %s20 = ssub.s32 %s15, 1
      %s21 = ssub.s32 %s15, 2
      %s22 = sadd.s32 %s15, 1
      %s23 = ssub.s32 %s15, %s22
      %p24 = scmp.eq.s32.totalorder %s23, 0
      %s26 = sadd.s32 %s25, 1
      %s27 = scalar_select %p24, %s25, %s26
      %p30 = pneg %p24
      %p31 = scmp.eq.s32.totalorder %s15, 1
      %p32 = por %p30, %p31
      %p33 = scmp.ne.s32.totalorder %s25, %s28
      %p34 = scmp.eq.s32.totalorder %s15, 0
      %p35 = por %p33, %p34
      %p36 = scmp.ne.s32.totalorder %s25, %s28
      %p37 = scmp.eq.s32.totalorder %s20, 1
      %p38 = por %p36, %p37
      %p39 = scmp.ne.s32.totalorder %s28, %s29
      %p40 = scmp.eq.s32.totalorder %s20, 0
      %p41 = por %p39, %p40
      %p42 = scmp.ne.s32.totalorder %s28, %s29
      %p43 = scmp.eq.s32.totalorder %s21, 1
      %p44 = por %p42, %p43
      %p46 = scmp.ne.s32.totalorder %s29, %s45
      %p47 = scmp.eq.s32.totalorder %s21, 0
      %p48 = por %p46, %p47
      %s50 = sadd.s32 %s49, 1
      %p53 = scmp.eq.s32.totalorder %s15, 1
      %p54 = scmp.ne.s32.totalorder %s49, %s51
      %p55 = scmp.eq.s32.totalorder %s15, 0
      %p56 = por %p54, %p55
      %p57 = scmp.ne.s32.totalorder %s49, %s51
      %p58 = scmp.eq.s32.totalorder %s20, 1
      %p59 = por %p57, %p58
      %p60 = scmp.ne.s32.totalorder %s51, %s52
      %p61 = scmp.eq.s32.totalorder %s20, 0
      %p62 = por %p60, %p61
      %p63 = scmp.ne.s32.totalorder %s51, %s52
      %p64 = scmp.eq.s32.totalorder %s21, 1
      %p65 = por %p63, %p64
      %p67 = scmp.ne.s32.totalorder %s52, %s66
      %p68 = scmp.eq.s32.totalorder %s21, 0
      %p69 = por %p67, %p68
      %s71 = sadd.s32 %s70, 1
      %p74 = scmp.eq.s32.totalorder %s15, 1
      %p75 = scmp.ne.s32.totalorder %s70, %s72
      %p76 = scmp.eq.s32.totalorder %s15, 0
      %p77 = por %p75, %p76
      %p78 = scmp.ne.s32.totalorder %s70, %s72
      %p79 = scmp.eq.s32.totalorder %s20, 1
      %p80 = por %p78, %p79
      %p81 = scmp.ne.s32.totalorder %s72, %s73
      %p82 = scmp.eq.s32.totalorder %s20, 0
      %p83 = por %p81, %p82
      %p84 = scmp.ne.s32.totalorder %s72, %s73
      %p85 = scmp.eq.s32.totalorder %s21, 1
      %p86 = por %p84, %p85
      %p88 = scmp.ne.s32.totalorder %s73, %s87
      %p89 = scmp.eq.s32.totalorder %s21, 0
      %p90 = por %p88, %p89
      %s91 = ssub.s32 %s15, %s22
      %p92 = scmp.eq.s32.totalorder %s91, 0
      %s94 = sadd.s32 %s93, 1
      %s95 = scalar_select %p92, %s93, %s94
      %p98 = pneg %p92
      %p99 = scmp.eq.s32.totalorder %s15, 1
      %p100 = por %p98, %p99
      %p101 = scmp.ne.s32.totalorder %s93, %s96
      %p102 = scmp.eq.s32.totalorder %s15, 0
      %p103 = por %p101, %p102
      %p104 = scmp.ne.s32.totalorder %s93, %s96
      %p105 = scmp.eq.s32.totalorder %s20, 1
      %p106 = por %p104, %p105
      %p107 = scmp.ne.s32.totalorder %s96, %s97
      %p108 = scmp.eq.s32.totalorder %s20, 0
      %p109 = por %p107, %p108
      %p110 = scmp.ne.s32.totalorder %s96, %s97
      %p111 = scmp.eq.s32.totalorder %s21, 1
      %p112 = por %p110, %p111
      %p114 = scmp.ne.s32.totalorder %s97, %s113
      %p115 = scmp.eq.s32.totalorder %s21, 0
      %p116 = por %p114, %p115
      %p117 = scmp.le.s32.totalorder 1, %s15
      %p118 = scmp.lt.s32.totalorder %s15, 3
      %p119 = pnand %p117, %p118
      %p120 = pneg %p119
      // Predicated region
      $region9: #{tpu_custom_call.1} parent=5 // pred_check
        _
      $region10: #{tpu_custom_call.1} parent=5 // pred_check_branch
        %122 = sbr.rel (%p119) target = $region12
      $region11: #{tpu_custom_call.1} parent=5 // pred_region
        %s123 = ssub.s32 %s15, 1
        // Predicated region
        $region13: #{tpu_custom_call.1} parent=11 // pred_check
          %p124 = pneg %p62
        $region14: #{tpu_custom_call.1} parent=11 // pred_check_branch
          %126 = sbr.rel (%p124) target = $region16
        $region15: #{tpu_custom_call.1} parent=11 // pred_region
          _
        $region16: #{tpu_custom_call.1} parent=11 // pred_fallthru
          _
        // Predicated region
        $region17: #{tpu_custom_call.1} parent=11 // pred_check
          %p127 = pneg %p83
        $region18: #{tpu_custom_call.1} parent=11 // pred_check_branch
          %129 = sbr.rel (%p127) target = $region20
        $region19: #{tpu_custom_call.1} parent=11 // pred_region
          _
        $region20: #{tpu_custom_call.1} parent=11 // pred_fallthru
          _
      $region12: #{tpu_custom_call.1} parent=5 // pred_fallthru
        _
      %p130 = scmp.lt.s32.totalorder %s15, 2
      // Predicated region
      $region21: #{tpu_custom_call.1} parent=5 // pred_check
        %p131 = pneg %p130
      $region22: #{tpu_custom_call.1} parent=5 // pred_check_branch
        %133 = sbr.rel (%p131) target = $region24
      $region23: #{tpu_custom_call.1} parent=5 // pred_region
        // Predicated region
        $region25: #{tpu_custom_call.1} parent=23 // pred_check
          %p134 = pneg %p35
        $region26: #{tpu_custom_call.1} parent=23 // pred_check_branch
          %136 = sbr.rel (%p134) target = $region28
        $region27: #{tpu_custom_call.1} parent=23 // pred_region
          %s137 = sand.u32 %s25, 1
          %s138 = scalar_lea.sflag [#allocation3], %s137
          %s139 = sand.u32 %s25, 1
          %s140 = smul.addr %s139, 8
          %s141 = scalar_lea.vmem [#allocation2], %s140
          %s143 = ssub.s32 128, 128
          %144 = vsyncadd %s138, %s143
          %s145 = smul.addr %s15, 2
          %s146 = smul.addr %s145, 64
          %s147 = scalar_lea.hbm %s0, %s146
          %s149 = sshll.u32 %s141, 4
          %s150 = int_to_ptr.vmem [resolvable:$true] %s149
          %152 = dma.hbm_to_vmem [thread:$0]  %s147, 128, %s150, %s138
        $region28: #{tpu_custom_call.1} parent=23 // pred_fallthru
          _
      $region24: #{tpu_custom_call.1} parent=5 // pred_fallthru
        _
      %p153 = scmp.le.s32.totalorder 1, %s15
      %p154 = scmp.lt.s32.totalorder %s15, 3
      %p155 = pnand %p153, %p154
      %p156 = pneg %p155
      // Predicated region
      $region29: #{tpu_custom_call.1} parent=5 // pred_check
        _
      $region30: #{tpu_custom_call.1} parent=5 // pred_check_branch
        %158 = sbr.rel (%p155) target = $region32
      $region31: #{tpu_custom_call.1} parent=5 // pred_region
        %s159 = ssub.s32 %s15, 1
        %s160 = sand.u32 %s28, 1
        %s161 = scalar_lea.sflag [#allocation3], %s160
        %s162 = sand.u32 %s28, 1
        %s163 = smul.addr %s162, 8
        %s164 = scalar_lea.vmem [#allocation2], %s163
        // Predicated region
        $region33: #{tpu_custom_call.1} parent=31 // pred_check
          %p165 = pneg %p41
        $region34: #{tpu_custom_call.1} parent=31 // pred_check_branch
          %167 = sbr.rel (%p165) target = $region36
        $region35: #{tpu_custom_call.1} parent=31 // pred_region
          %168 = dma.done %s161, 128
        $region36: #{tpu_custom_call.1} parent=31 // pred_fallthru
          _
        %s169 = sand.u32 %s28, 1
        %s170 = scalar_lea.sflag [#allocation3], %s169
        %s171 = sand.u32 %s28, 1
        %s172 = smul.addr %s171, 8
        %s173 = scalar_lea.vmem [#allocation2], %s172
        %p174 = pneg %p41
        %p175 = pneg %p38
        %p176 = pneg %p62
        %p177 = pneg %p59
        %p178 = pneg %p83
        %p179 = pneg %p80
        %p180 = pneg %p109
        %p181 = pneg %p106
        %s182 = sand.u32 %s96, 1
        %s183 = scalar_lea.sflag [#allocation4], %s182
        %s184 = sand.u32 %s96, 1
        %s185 = smul.addr %s184, 4
        %s186 = scalar_lea.vmem [#allocation5], %s185
        %v187 = vld [vmem:[%s164] sm:$0xff]
        %v188 = vld [vmem:[%s1] sm:$0x3]
        %v189 = vld [vmem:[%s2] sm:$0x3]
        %191 = vset.pattern.permute.xlu0 0
        %192 = vperm.xlu0 %191, %v189
        %v193 = vpop.permute.xlu0 %192
        %v196 = vcombine.high %v187, %v187
        %vm197 = vcmask 31744
        %v199 = vsel %vm197, %v188, 0
        %vm201 = vcmask 1043456
        %v202 = vsel %vm201, %v187, 0
        %v204 = vsel %vm201, %v196, 0
        %206 = vmatprep.subr.mxu0 0.0
        %207 = vmatpush1.msra.mxu0 0.0
        %208 = vmatprep.subr.mxu0 0.0
        %209 = vmatpush1.msra.mxu0 0.0
        %210 = vmatprep.subr.mxu0 0.0
        %211 = vmatpush1.msra.mxu0 0.0
        %212 = vmatprep.subr.mxu0 0.0
        %213 = vmatpush1.msra.mxu0 0.0
        %214 = vmatprep.subr.mxu0 0.0
        %215 = vmatpush1.msra.mxu0 0.0
        %216 = vmatprep.subr.mxu0 0.0
        %217 = vmatpush1.msra.mxu0 0.0
        %218 = vmatprep.subr.mxu0 0.0
        %219 = vmatpush1.msra.mxu0 0.0
        %220 = vmatprep.subr.mxu0 0.0
        %221 = vmatpush1.msra.mxu0 0.0
        %222 = vmatprep.subr.mxu0 0.0
        %223 = vmatpush1.msra.mxu0 0.0
        %224 = vmatprep.subr.mxu0 0.0
        %225 = vmatpush1.msra.mxu0 0.0
        %226 = vmatprep.subr.mxu0 0.0
        %227 = vmatpush1.msra.mxu0 0.0
        %228 = vmatprep.subr.mxu0 0.0
        %229 = vmatpush1.msra.mxu0 0.0
        %230 = vmatprep.subr.mxu0 0.0
        %231 = vmatpush1.msra.mxu0 0.0
        %232 = vmatprep.subr.mxu0 0.0
        %233 = vmatpush1.msra.mxu0 0.0
        %234 = vmatprep.subr.mxu0 0.0
        %235 = vmatpush1.msra.mxu0 0.0
        %v236 = vand.u32 %v204, 4294901760
        %237 = vmatprep.subr.mxu0 %v236
        %v238 = vand.u32 %v202, 4294901760
        %239 = vmatpush1.msra.mxu0 %v238
        %240 = vmatprep.subr.mxu0 0.0
        %241 = vmatpush2.msra.mxu0 0.0
        %242 = vmatprep.subr.mxu0 0.0
        %243 = vmatpush2.msra.mxu0 0.0
        %244 = vmatprep.subr.mxu0 0.0
        %245 = vmatpush2.msra.mxu0 0.0
        %246 = vmatprep.subr.mxu0 0.0
        %247 = vmatpush2.msra.mxu0 0.0
        %248 = vmatprep.subr.mxu0 0.0
        %249 = vmatpush2.msra.mxu0 0.0
        %250 = vmatprep.subr.mxu0 0.0
        %251 = vmatpush2.msra.mxu0 0.0
        %252 = vmatprep.subr.mxu0 0.0
        %253 = vmatpush2.msra.mxu0 0.0
        %254 = vmatprep.subr.mxu0 0.0
        %255 = vmatpush2.msra.mxu0 0.0
        %256 = vmatprep.subr.mxu0 0.0
        %257 = vmatpush2.msra.mxu0 0.0
        %258 = vmatprep.subr.mxu0 0.0
        %259 = vmatpush2.msra.mxu0 0.0
        %260 = vmatprep.subr.mxu0 0.0
        %261 = vmatpush2.msra.mxu0 0.0
        %262 = vmatprep.subr.mxu0 0.0
        %263 = vmatpush2.msra.mxu0 0.0
        %264 = vmatprep.subr.mxu0 0.0
        %265 = vmatpush2.msra.mxu0 0.0
        %266 = vmatprep.subr.mxu0 0.0
        %267 = vmatpush2.msra.mxu0 0.0
        %268 = vmatprep.subr.mxu0 0.0
        %269 = vmatpush2.msra.mxu0 0.0
        %270 = vmatprep.subr.mxu0 0.0
        %271 = vmatpush2.msra.mxu0 0.0
        %272 = vmatprep.mubr.f32.mxu0 0.0
        %v273 = vand.u32 %v199, 4294901760
        %v274 = vsub.f32 %v199, %v273
        %v275 = vand.u32 %v274, 4294901760
        %v276 = vsub.f32 %v274, %v275
        %v277 = vand.u32 %v276, 4294901760
        %278 = vmatmul.mubr.f32.gmra.mxu0 %v277
        %v279 = vpop.f32.mrf.mxu0
        %v280 = vadd.f32 %v193, %v279
        %v281 = vpop.f32.mrf.mxu0
        %v282 = vadd.f32 %v193, %v281
        %283 = vdwg.mxu0
        %284 = vmatprep.subr.mxu0 0.0
        %285 = vmatpush1.msra.mxu0 0.0
        %286 = vmatprep.subr.mxu0 0.0
        %287 = vmatpush1.msra.mxu0 0.0
        %288 = vmatprep.subr.mxu0 0.0
        %289 = vmatpush1.msra.mxu0 0.0
        %290 = vmatprep.subr.mxu0 0.0
        %291 = vmatpush1.msra.mxu0 0.0
        %292 = vmatprep.subr.mxu0 0.0
        %293 = vmatpush1.msra.mxu0 0.0
        %294 = vmatprep.subr.mxu0 0.0
        %295 = vmatpush1.msra.mxu0 0.0
        %296 = vmatprep.subr.mxu0 0.0
        %297 = vmatpush1.msra.mxu0 0.0
        %298 = vmatprep.subr.mxu0 0.0
        %299 = vmatpush1.msra.mxu0 0.0
        %300 = vmatprep.subr.mxu0 0.0
        %301 = vmatpush1.msra.mxu0 0.0
        %302 = vmatprep.subr.mxu0 0.0
        %303 = vmatpush1.msra.mxu0 0.0
        %304 = vmatprep.subr.mxu0 0.0
        %305 = vmatpush1.msra.mxu0 0.0
        %306 = vmatprep.subr.mxu0 0.0
        %307 = vmatpush1.msra.mxu0 0.0
        %308 = vmatprep.subr.mxu0 0.0
        %309 = vmatpush1.msra.mxu0 0.0
        %310 = vmatprep.subr.mxu0 0.0
        %311 = vmatpush1.msra.mxu0 0.0
        %312 = vmatprep.subr.mxu0 0.0
        %313 = vmatpush1.msra.mxu0 0.0
        %v314 = vand.u32 %v204, 4294901760
        %v315 = vsub.f32 %v204, %v314
        %v316 = vand.u32 %v315, 4294901760
        %v317 = vsub.f32 %v315, %v316
        %v318 = vand.u32 %v317, 4294901760
        %319 = vmatprep.subr.mxu0 %v318
        %v320 = vand.u32 %v202, 4294901760
        %v321 = vsub.f32 %v202, %v320
        %v322 = vand.u32 %v321, 4294901760
        %v323 = vsub.f32 %v321, %v322
        %v324 = vand.u32 %v323, 4294901760
        %325 = vmatpush1.msra.mxu0 %v324
        %326 = vmatprep.subr.mxu0 0.0
        %327 = vmatpush2.msra.mxu0 0.0
        %328 = vmatprep.subr.mxu0 0.0
        %329 = vmatpush2.msra.mxu0 0.0
        %330 = vmatprep.subr.mxu0 0.0
        %331 = vmatpush2.msra.mxu0 0.0
        %332 = vmatprep.subr.mxu0 0.0
        %333 = vmatpush2.msra.mxu0 0.0
        %334 = vmatprep.subr.mxu0 0.0
        %335 = vmatpush2.msra.mxu0 0.0
        %336 = vmatprep.subr.mxu0 0.0
        %337 = vmatpush2.msra.mxu0 0.0
        %338 = vmatprep.subr.mxu0 0.0
        %339 = vmatpush2.msra.mxu0 0.0
        %340 = vmatprep.subr.mxu0 0.0
        %341 = vmatpush2.msra.mxu0 0.0
        %342 = vmatprep.subr.mxu0 0.0
        %343 = vmatpush2.msra.mxu0 0.0
        %344 = vmatprep.subr.mxu0 0.0
        %345 = vmatpush2.msra.mxu0 0.0
        %346 = vmatprep.subr.mxu0 0.0
        %347 = vmatpush2.msra.mxu0 0.0
        %348 = vmatprep.subr.mxu0 0.0
        %349 = vmatpush2.msra.mxu0 0.0
        %350 = vmatprep.subr.mxu0 0.0
        %351 = vmatpush2.msra.mxu0 0.0
        %352 = vmatprep.subr.mxu0 0.0
        %353 = vmatpush2.msra.mxu0 0.0
        %354 = vmatprep.subr.mxu0 0.0
        %355 = vmatpush2.msra.mxu0 0.0
        %356 = vmatprep.subr.mxu0 0.0
        %357 = vmatpush2.msra.mxu0 0.0
        %358 = vmatprep.mubr.f32.mxu0 0.0
        %v359 = vand.u32 %v199, 4294901760
        %360 = vmatmul.mubr.f32.gmra.mxu0 %v359
        %v361 = vpop.f32.mrf.mxu0
        %v362 = vadd.f32 %v280, %v361
        %v363 = vpop.f32.mrf.mxu0
        %v364 = vadd.f32 %v282, %v363
        %365 = vdwg.mxu0
        %366 = vmatprep.subr.mxu0 0.0
        %367 = vmatpush1.msra.mxu0 0.0
        %368 = vmatprep.subr.mxu0 0.0
        %369 = vmatpush1.msra.mxu0 0.0
        %370 = vmatprep.subr.mxu0 0.0
        %371 = vmatpush1.msra.mxu0 0.0
        %372 = vmatprep.subr.mxu0 0.0
        %373 = vmatpush1.msra.mxu0 0.0
        %374 = vmatprep.subr.mxu0 0.0
        %375 = vmatpush1.msra.mxu0 0.0
        %376 = vmatprep.subr.mxu0 0.0
        %377 = vmatpush1.msra.mxu0 0.0
        %378 = vmatprep.subr.mxu0 0.0
        %379 = vmatpush1.msra.mxu0 0.0
        %380 = vmatprep.subr.mxu0 0.0
        %381 = vmatpush1.msra.mxu0 0.0
        %382 = vmatprep.subr.mxu0 0.0
        %383 = vmatpush1.msra.mxu0 0.0
        %384 = vmatprep.subr.mxu0 0.0
        %385 = vmatpush1.msra.mxu0 0.0
        %386 = vmatprep.subr.mxu0 0.0
        %387 = vmatpush1.msra.mxu0 0.0
        %388 = vmatprep.subr.mxu0 0.0
        %389 = vmatpush1.msra.mxu0 0.0
        %390 = vmatprep.subr.mxu0 0.0
        %391 = vmatpush1.msra.mxu0 0.0
        %392 = vmatprep.subr.mxu0 0.0
        %393 = vmatpush1.msra.mxu0 0.0
        %394 = vmatprep.subr.mxu0 0.0
        %395 = vmatpush1.msra.mxu0 0.0
        %v396 = vand.u32 %v204, 4294901760
        %v397 = vsub.f32 %v204, %v396
        %398 = vmatprep.subr.mxu0 %v397
        %v399 = vand.u32 %v202, 4294901760
        %v400 = vsub.f32 %v202, %v399
        %401 = vmatpush1.msra.mxu0 %v400
        %402 = vmatprep.subr.mxu0 0.0
        %403 = vmatpush2.msra.mxu0 0.0
        %404 = vmatprep.subr.mxu0 0.0
        %405 = vmatpush2.msra.mxu0 0.0
        %406 = vmatprep.subr.mxu0 0.0
        %407 = vmatpush2.msra.mxu0 0.0
        %408 = vmatprep.subr.mxu0 0.0
        %409 = vmatpush2.msra.mxu0 0.0
        %410 = vmatprep.subr.mxu0 0.0
        %411 = vmatpush2.msra.mxu0 0.0
        %412 = vmatprep.subr.mxu0 0.0
        %413 = vmatpush2.msra.mxu0 0.0
        %414 = vmatprep.subr.mxu0 0.0
        %415 = vmatpush2.msra.mxu0 0.0
        %416 = vmatprep.subr.mxu0 0.0
        %417 = vmatpush2.msra.mxu0 0.0
        %418 = vmatprep.subr.mxu0 0.0
        %419 = vmatpush2.msra.mxu0 0.0
        %420 = vmatprep.subr.mxu0 0.0
        %421 = vmatpush2.msra.mxu0 0.0
        %422 = vmatprep.subr.mxu0 0.0
        %423 = vmatpush2.msra.mxu0 0.0
        %424 = vmatprep.subr.mxu0 0.0
        %425 = vmatpush2.msra.mxu0 0.0
        %426 = vmatprep.subr.mxu0 0.0
        %427 = vmatpush2.msra.mxu0 0.0
        %428 = vmatprep.subr.mxu0 0.0
        %429 = vmatpush2.msra.mxu0 0.0
        %430 = vmatprep.subr.mxu0 0.0
        %431 = vmatpush2.msra.mxu0 0.0
        %432 = vmatprep.subr.mxu0 0.0
        %433 = vmatpush2.msra.mxu0 0.0
        %434 = vmatprep.mubr.f32.mxu0 0.0
        %v435 = vand.u32 %v199, 4294901760
        %v436 = vsub.f32 %v199, %v435
        %437 = vmatmul.mubr.f32.gmra.mxu0 %v436
        %v438 = vpop.f32.mrf.mxu0
        %v439 = vadd.f32 %v362, %v438
        %v440 = vpop.f32.mrf.mxu0
        %v441 = vadd.f32 %v364, %v440
        %442 = vdwg.mxu0
        %443 = vmatprep.subr.mxu0 0.0
        %444 = vmatpush1.msra.mxu0 0.0
        %445 = vmatprep.subr.mxu0 0.0
        %446 = vmatpush1.msra.mxu0 0.0
        %447 = vmatprep.subr.mxu0 0.0
        %448 = vmatpush1.msra.mxu0 0.0
        %449 = vmatprep.subr.mxu0 0.0
        %450 = vmatpush1.msra.mxu0 0.0
        %451 = vmatprep.subr.mxu0 0.0
        %452 = vmatpush1.msra.mxu0 0.0
        %453 = vmatprep.subr.mxu0 0.0
        %454 = vmatpush1.msra.mxu0 0.0
        %455 = vmatprep.subr.mxu0 0.0
        %456 = vmatpush1.msra.mxu0 0.0
        %457 = vmatprep.subr.mxu0 0.0
        %458 = vmatpush1.msra.mxu0 0.0
        %459 = vmatprep.subr.mxu0 0.0
        %460 = vmatpush1.msra.mxu0 0.0
        %461 = vmatprep.subr.mxu0 0.0
        %462 = vmatpush1.msra.mxu0 0.0
        %463 = vmatprep.subr.mxu0 0.0
        %464 = vmatpush1.msra.mxu0 0.0
        %465 = vmatprep.subr.mxu0 0.0
        %466 = vmatpush1.msra.mxu0 0.0
        %467 = vmatprep.subr.mxu0 0.0
        %468 = vmatpush1.msra.mxu0 0.0
        %469 = vmatprep.subr.mxu0 0.0
        %470 = vmatpush1.msra.mxu0 0.0
        %471 = vmatprep.subr.mxu0 0.0
        %472 = vmatpush1.msra.mxu0 0.0
        %v473 = vand.u32 %v204, 4294901760
        %474 = vmatprep.subr.mxu0 %v473
        %v475 = vand.u32 %v202, 4294901760
        %476 = vmatpush1.msra.mxu0 %v475
        %477 = vmatprep.subr.mxu0 0.0
        %478 = vmatpush2.msra.mxu0 0.0
        %479 = vmatprep.subr.mxu0 0.0
        %480 = vmatpush2.msra.mxu0 0.0
        %481 = vmatprep.subr.mxu0 0.0
        %482 = vmatpush2.msra.mxu0 0.0
        %483 = vmatprep.subr.mxu0 0.0
        %484 = vmatpush2.msra.mxu0 0.0
        %485 = vmatprep.subr.mxu0 0.0
        %486 = vmatpush2.msra.mxu0 0.0
        %487 = vmatprep.subr.mxu0 0.0
        %488 = vmatpush2.msra.mxu0 0.0
        %489 = vmatprep.subr.mxu0 0.0
        %490 = vmatpush2.msra.mxu0 0.0
        %491 = vmatprep.subr.mxu0 0.0
        %492 = vmatpush2.msra.mxu0 0.0
        %493 = vmatprep.subr.mxu0 0.0
        %494 = vmatpush2.msra.mxu0 0.0
        %495 = vmatprep.subr.mxu0 0.0
        %496 = vmatpush2.msra.mxu0 0.0
        %497 = vmatprep.subr.mxu0 0.0
        %498 = vmatpush2.msra.mxu0 0.0
        %499 = vmatprep.subr.mxu0 0.0
        %500 = vmatpush2.msra.mxu0 0.0
        %501 = vmatprep.subr.mxu0 0.0
        %502 = vmatpush2.msra.mxu0 0.0
        %503 = vmatprep.subr.mxu0 0.0
        %504 = vmatpush2.msra.mxu0 0.0
        %505 = vmatprep.subr.mxu0 0.0
        %506 = vmatpush2.msra.mxu0 0.0
        %507 = vmatprep.subr.mxu0 0.0
        %508 = vmatpush2.msra.mxu0 0.0
        %509 = vmatprep.mubr.f32.mxu0 0.0
        %v510 = vand.u32 %v199, 4294901760
        %v511 = vsub.f32 %v199, %v510
        %v512 = vand.u32 %v511, 4294901760
        %513 = vmatmul.mubr.f32.gmra.mxu0 %v512
        %v514 = vpop.f32.mrf.mxu0
        %v515 = vadd.f32 %v439, %v514
        %v516 = vpop.f32.mrf.mxu0
        %v517 = vadd.f32 %v441, %v516
        %518 = vdwg.mxu0
        %519 = vmatprep.subr.mxu0 0.0
        %520 = vmatpush1.msra.mxu0 0.0
        %521 = vmatprep.subr.mxu0 0.0
        %522 = vmatpush1.msra.mxu0 0.0
        %523 = vmatprep.subr.mxu0 0.0
        %524 = vmatpush1.msra.mxu0 0.0
        %525 = vmatprep.subr.mxu0 0.0
        %526 = vmatpush1.msra.mxu0 0.0
        %527 = vmatprep.subr.mxu0 0.0
        %528 = vmatpush1.msra.mxu0 0.0
        %529 = vmatprep.subr.mxu0 0.0
        %530 = vmatpush1.msra.mxu0 0.0
        %531 = vmatprep.subr.mxu0 0.0
        %532 = vmatpush1.msra.mxu0 0.0
        %533 = vmatprep.subr.mxu0 0.0
        %534 = vmatpush1.msra.mxu0 0.0
        %535 = vmatprep.subr.mxu0 0.0
        %536 = vmatpush1.msra.mxu0 0.0
        %537 = vmatprep.subr.mxu0 0.0
        %538 = vmatpush1.msra.mxu0 0.0
        %539 = vmatprep.subr.mxu0 0.0
        %540 = vmatpush1.msra.mxu0 0.0
        %541 = vmatprep.subr.mxu0 0.0
        %542 = vmatpush1.msra.mxu0 0.0
        %543 = vmatprep.subr.mxu0 0.0
        %544 = vmatpush1.msra.mxu0 0.0
        %545 = vmatprep.subr.mxu0 0.0
        %546 = vmatpush1.msra.mxu0 0.0
        %547 = vmatprep.subr.mxu0 0.0
        %548 = vmatpush1.msra.mxu0 0.0
        %v549 = vand.u32 %v204, 4294901760
        %v550 = vsub.f32 %v204, %v549
        %v551 = vand.u32 %v550, 4294901760
        %552 = vmatprep.subr.mxu0 %v551
        %v553 = vand.u32 %v202, 4294901760
        %v554 = vsub.f32 %v202, %v553
        %v555 = vand.u32 %v554, 4294901760
        %556 = vmatpush1.msra.mxu0 %v555
        %557 = vmatprep.subr.mxu0 0.0
        %558 = vmatpush2.msra.mxu0 0.0
        %559 = vmatprep.subr.mxu0 0.0
        %560 = vmatpush2.msra.mxu0 0.0
        %561 = vmatprep.subr.mxu0 0.0
        %562 = vmatpush2.msra.mxu0 0.0
        %563 = vmatprep.subr.mxu0 0.0
        %564 = vmatpush2.msra.mxu0 0.0
        %565 = vmatprep.subr.mxu0 0.0
        %566 = vmatpush2.msra.mxu0 0.0
        %567 = vmatprep.subr.mxu0 0.0
        %568 = vmatpush2.msra.mxu0 0.0
        %569 = vmatprep.subr.mxu0 0.0
        %570 = vmatpush2.msra.mxu0 0.0
        %571 = vmatprep.subr.mxu0 0.0
        %572 = vmatpush2.msra.mxu0 0.0
        %573 = vmatprep.subr.mxu0 0.0
        %574 = vmatpush2.msra.mxu0 0.0
        %575 = vmatprep.subr.mxu0 0.0
        %576 = vmatpush2.msra.mxu0 0.0
        %577 = vmatprep.subr.mxu0 0.0
        %578 = vmatpush2.msra.mxu0 0.0
        %579 = vmatprep.subr.mxu0 0.0
        %580 = vmatpush2.msra.mxu0 0.0
        %581 = vmatprep.subr.mxu0 0.0
        %582 = vmatpush2.msra.mxu0 0.0
        %583 = vmatprep.subr.mxu0 0.0
        %584 = vmatpush2.msra.mxu0 0.0
        %585 = vmatprep.subr.mxu0 0.0
        %586 = vmatpush2.msra.mxu0 0.0
        %587 = vmatprep.subr.mxu0 0.0
        %588 = vmatpush2.msra.mxu0 0.0
        %589 = vmatprep.mubr.f32.mxu0 0.0
        %v590 = vand.u32 %v199, 4294901760
        %591 = vmatmul.mubr.f32.gmra.mxu0 %v590
        %v592 = vpop.f32.mrf.mxu0
        %v593 = vadd.f32 %v515, %v592
        %v594 = vpop.f32.mrf.mxu0
        %v595 = vadd.f32 %v517, %v594
        %596 = vdwg.mxu0
        %597 = vmatprep.subr.mxu0 0.0
        %598 = vmatpush1.msra.mxu0 0.0
        %599 = vmatprep.subr.mxu0 0.0
        %600 = vmatpush1.msra.mxu0 0.0
        %601 = vmatprep.subr.mxu0 0.0
        %602 = vmatpush1.msra.mxu0 0.0
        %603 = vmatprep.subr.mxu0 0.0
        %604 = vmatpush1.msra.mxu0 0.0
        %605 = vmatprep.subr.mxu0 0.0
        %606 = vmatpush1.msra.mxu0 0.0
        %607 = vmatprep.subr.mxu0 0.0
        %608 = vmatpush1.msra.mxu0 0.0
        %609 = vmatprep.subr.mxu0 0.0
        %610 = vmatpush1.msra.mxu0 0.0
        %611 = vmatprep.subr.mxu0 0.0
        %612 = vmatpush1.msra.mxu0 0.0
        %613 = vmatprep.subr.mxu0 0.0
        %614 = vmatpush1.msra.mxu0 0.0
        %615 = vmatprep.subr.mxu0 0.0
        %616 = vmatpush1.msra.mxu0 0.0
        %617 = vmatprep.subr.mxu0 0.0
        %618 = vmatpush1.msra.mxu0 0.0
        %619 = vmatprep.subr.mxu0 0.0
        %620 = vmatpush1.msra.mxu0 0.0
        %621 = vmatprep.subr.mxu0 0.0
        %622 = vmatpush1.msra.mxu0 0.0
        %623 = vmatprep.subr.mxu0 0.0
        %624 = vmatpush1.msra.mxu0 0.0
        %625 = vmatprep.subr.mxu0 0.0
        %626 = vmatpush1.msra.mxu0 0.0
        %v627 = vand.u32 %v204, 4294901760
        %628 = vmatprep.subr.mxu0 %v627
        %v629 = vand.u32 %v202, 4294901760
        %630 = vmatpush1.msra.mxu0 %v629
        %631 = vmatprep.subr.mxu0 0.0
        %632 = vmatpush2.msra.mxu0 0.0
        %633 = vmatprep.subr.mxu0 0.0
        %634 = vmatpush2.msra.mxu0 0.0
        %635 = vmatprep.subr.mxu0 0.0
        %636 = vmatpush2.msra.mxu0 0.0
        %637 = vmatprep.subr.mxu0 0.0
        %638 = vmatpush2.msra.mxu0 0.0
        %639 = vmatprep.subr.mxu0 0.0
        %640 = vmatpush2.msra.mxu0 0.0
        %641 = vmatprep.subr.mxu0 0.0
        %642 = vmatpush2.msra.mxu0 0.0
        %643 = vmatprep.subr.mxu0 0.0
        %644 = vmatpush2.msra.mxu0 0.0
        %645 = vmatprep.subr.mxu0 0.0
        %646 = vmatpush2.msra.mxu0 0.0
        %647 = vmatprep.subr.mxu0 0.0
        %648 = vmatpush2.msra.mxu0 0.0
        %649 = vmatprep.subr.mxu0 0.0
        %650 = vmatpush2.msra.mxu0 0.0
        %651 = vmatprep.subr.mxu0 0.0
        %652 = vmatpush2.msra.mxu0 0.0
        %653 = vmatprep.subr.mxu0 0.0
        %654 = vmatpush2.msra.mxu0 0.0
        %655 = vmatprep.subr.mxu0 0.0
        %656 = vmatpush2.msra.mxu0 0.0
        %657 = vmatprep.subr.mxu0 0.0
        %658 = vmatpush2.msra.mxu0 0.0
        %659 = vmatprep.subr.mxu0 0.0
        %660 = vmatpush2.msra.mxu0 0.0
        %661 = vmatprep.subr.mxu0 0.0
        %662 = vmatpush2.msra.mxu0 0.0
        %663 = vmatprep.mubr.f32.mxu0 0.0
        %v664 = vand.u32 %v199, 4294901760
        %665 = vmatmul.mubr.f32.gmra.mxu0 %v664
        %v666 = vpop.f32.mrf.mxu0
        %v667 = vadd.f32 %v593, %v666
        %v668 = vpop.f32.mrf.mxu0
        %v669 = vadd.f32 %v595, %v668
        %670 = vdwg.mxu0
        %v671 = vmul.f32 %v667, 0.5
        %v672 = vmul.f32 %v669, 0.5
        %v673 = vtanh.pop %v671
        %v674 = vtanh.pop %v672
        %v675 = vmul.f32 %v673, 0.5
        %v676 = vmul.f32 %v674, 0.5
        %v677 = vadd.f32 %v675, 0.5
        %v678 = vadd.f32 %v676, 0.5
        %v681 = vcombine.low %v677, %v678
        %v683 = vunpack.c.l.s4 1983009808
        %v684 = vunpack.c.0.s8 %v683
        %v685 = vlaneseq
        %v686 = vshrl.u32 %v685, 7
        %v687 = vsub.s32 %v684, %v686
        %v688 = vrot.slane %v681, %v687
        %690 = vst [vmem:[%s186] sm:$0xf] %v688
        %s691 = sand.u32 %s96, 1
        %s692 = scalar_lea.sflag [#allocation4], %s691
        %s693 = sand.u32 %s96, 1
        %s694 = smul.addr %s693, 4
        %s695 = scalar_lea.vmem [#allocation5], %s694
        // Predicated region
        $region37: #{tpu_custom_call.1} parent=31 // pred_check
          %p696 = pneg %p106
        $region38: #{tpu_custom_call.1} parent=31 // pred_check_branch
          %698 = sbr.rel (%p696) target = $region40
        $region39: #{tpu_custom_call.1} parent=31 // pred_region
          %s700 = ssub.s32 64, 64
          %701 = vsyncadd %s692, %s700
          %s702 = smul.addr %s20, 2
          %s703 = smul.addr %s702, 32
          %s704 = scalar_lea.hbm %s3, %s703
          %s706 = sshll.u32 %s695, 4
          %s707 = int_to_ptr.vmem [resolvable:$true] %s706
          %709 = dma.vmem_to_hbm [thread:$0]  %s707, 64, %s704, %s692
        $region40: #{tpu_custom_call.1} parent=31 // pred_fallthru
          _
      $region32: #{tpu_custom_call.1} parent=5 // pred_fallthru
        _
      %p710 = scmp.le.s32.totalorder 2, %s15
      // Predicated region
      $region41: #{tpu_custom_call.1} parent=5 // pred_check
        %p711 = pneg %p710
      $region42: #{tpu_custom_call.1} parent=5 // pred_check_branch
        %713 = sbr.rel (%p711) target = $region44
      $region43: #{tpu_custom_call.1} parent=5 // pred_region
        %s714 = ssub.s32 %s15, 2
        // Predicated region
        $region45: #{tpu_custom_call.1} parent=43 // pred_check
          %p715 = pneg %p112
        $region46: #{tpu_custom_call.1} parent=43 // pred_check_branch
          %717 = sbr.rel (%p715) target = $region48
        $region47: #{tpu_custom_call.1} parent=43 // pred_region
          %s718 = sand.u32 %s97, 1
          %s719 = scalar_lea.sflag [#allocation4], %s718
          %s720 = sand.u32 %s97, 1
          %s721 = smul.addr %s720, 4
          %s722 = scalar_lea.vmem [#allocation5], %s721
          %723 = dma.done %s719, 64
        $region48: #{tpu_custom_call.1} parent=43 // pred_fallthru
          _
      $region44: #{tpu_custom_call.1} parent=5 // pred_fallthru
        _
    $region6: #{tpu_custom_call.1} parent=1 // loop_footer
      %s19 = sadd.s32 1, %s15
    $region7: #{tpu_custom_call.1} parent=1 // loop_footer_branch
      %14 = sbr.rel target = $region3
    $region8: #{tpu_custom_call.1} parent=1 // loop_exit
      _
    %724 = vsyncpa [#allocation3], 1
    %s725 = scalar_lea.sflag [#allocation3], 1
    %726 = vsyncpa %s725, 1
    %727 = vsyncpa [#allocation4], 1
    %s728 = scalar_lea.sflag [#allocation4], 1
    %729 = vsyncpa %s728, 1

</llo_original>
